<compile_context>
chip_gen: v6e
topology: v6e:2x2x1
jax: 0.10.0
libtpu: 0.0.40
codegen_flags: <defaults>
</compile_context>

<pallas_src>
import math
import functools

import jax
import jax.numpy as jnp
from jax.experimental import pallas as pl
from jax.experimental.pallas import tpu as pltpu


def _round_up(n, m):
    return ((n + m - 1) // m) * m


def _arc_margin_kernel(x_ref, w_ref, *rest, s, cos_m, sin_m, th, mm,
                       easy_margin, train):
    if train:
        col_ref, lbl_ref, o_ref = rest
    else:
        (o_ref,) = rest

    # Inputs are pre-normalized, so the bf16 MXU dot is the cosine directly.
    # (TM, D) x (D, TN) -> (TM, TN), f32 accumulation, canonical contraction.
    cosine = jax.lax.dot_general(
        x_ref[...], w_ref[...],
        dimension_numbers=(((1,), (0,)), ((), ())),
        preferred_element_type=jnp.float32)

    # 1 - cos^2 <= 1 always, so only the lower clamp is needed (exact).
    sine = jnp.sqrt(jnp.maximum(1.0 - cosine * cosine, 0.0))
    phi = cosine * cos_m - sine * sin_m
    if easy_margin:
        phi = jnp.where(cosine > 0.0, phi, cosine)
    else:
        phi = jnp.where(cosine > th, phi, cosine - mm)

    if train:
        # Precomputed global class ids for this column tile vs per-row labels.
        one_hot = col_ref[...] == lbl_ref[...]            # (1,TN) == (TM,1)
        out = jnp.where(one_hot, phi, cosine)
    else:
        out = cosine

    o_ref[...] = (out * s).astype(o_ref.dtype)


class ArcMarginProductPallas:
    """JAX/Pallas equivalent of _ArcMarginProduct (forward pass)."""

    def __init__(self, in_features, out_features, s=30.0, m=0.5,
                 easy_margin=False, key=None, tm=512, tn=2048,
                 logits_dtype=jnp.float32):
        self.in_features = in_features
        self.out_features = out_features
        self.s = float(s)
        self.m = float(m)
        self.easy_margin = easy_margin
        self.cos_m = math.cos(m)
        self.sin_m = math.sin(m)
        self.th = math.cos(math.pi - m)
        self.mm = math.sin(math.pi - m) * m
        self.logits_dtype = logits_dtype

        # Deterministic xavier_uniform_ init for weight (out_features, in_features).
        if key is None:
            key = jax.random.PRNGKey(0)
        bound = math.sqrt(6.0 / (in_features + out_features))
        self.weight = jax.random.uniform(
            key, (out_features, in_features), dtype=jnp.float32,
            minval=-bound, maxval=bound)

        # Classes padded only to the lane width (128): no wasted TN columns,
        # the final slice (when needed at all) removes < 128 columns.
        self._cp = _round_up(out_features, 128)
        pad_c = self._cp - out_features

        # TN: largest 128-multiple that (a) divides Cp, (b) is <= the user cap,
        # (c) keeps one (D, TN) bf16 W tile under the per-tile stream budget.
        w_tile_budget = 8 << 20                                   # bytes / W tile
        lane_cap = max(128, (w_tile_budget // max(2 * in_features, 1)) // 128 * 128)
        cap = max(128, min(_round_up(int(tn), 128), lane_cap))
        nb = self._cp // 128
        best = 1
        for d in range(1, nb + 1):
            if nb % d == 0 and d * 128 <= cap:
                best = d
        self._tn = best * 128

        # TM cap: keep the double-buffered output tile modest.
        out_budget = 16 << 20
        tm_from_budget = max(16, (out_budget // (2 * 4 * self._tn)) // 16 * 16)
        self._tm_cap = max(16, min(_round_up(min(int(tm), 1024), 16), tm_from_budget))

        # Pre-normalize W rows in f32, pad, transpose to (D, Cp), cast to bf16.
        # One-time cost; the kernel dot is then the cosine and the W tile is
        # lane-dense regardless of D.
        w32 = self.weight
        wn = w32 / jnp.maximum(
            jnp.linalg.norm(w32, axis=-1, keepdims=True), 1e-12)
        wn = jnp.pad(wn, ((0, pad_c), (0, 0)))
        self._w_bf16 = jnp.asarray(wn.T, dtype=jnp.bfloat16)     # (D, Cp)
        # Global class indices, streamed per column tile on the train path.
        self._col_ids = jnp.arange(self._cp, dtype=jnp.int32).reshape(1, self._cp)

    def __call__(self, x, label=None, train=False):
        train = bool(train)
        if train and label is None:
            raise ValueError("label is required when train=True")

        B, D = x.shape
        assert D == self.in_features

        TM = self._tm_cap if B >= self._tm_cap else _round_up(B, 16)
        Bp = _round_up(B, TM)
        pad_b = Bp - B
        TN, Cp = self._tn, self._cp

        # Normalize x in f32, then cast to bf16 *before* padding.
        x32 = x.astype(jnp.float32)
        inv_x = 1.0 / jnp.maximum(
            jnp.linalg.norm(x32, axis=-1, keepdims=True), 1e-12)
        x_bf16 = (x32 * inv_x).astype(jnp.bfloat16)
        if pad_b:
            x_bf16 = jnp.pad(x_bf16, ((0, pad_b), (0, 0)))

        # Class tiles on the OUTER axis, batch tiles inner: the big streamed
        # operand (W, indexed only by j) keeps the same block index across the
        # inner axis and stays resident, so total W HBM traffic is Cp*D*2 bytes
        # instead of (Bp/TM) times that.
        grid = (Cp // TN, Bp // TM)

        in_specs = [
            pl.BlockSpec((TM, D), lambda j, i: (i, 0)),   # x tile (small, re-streamed)
            pl.BlockSpec((D, TN), lambda j, i: (0, j)),   # W tile (resident over i)
        ]
        args = [x_bf16, self._w_bf16]
        if train:
            lbl = label.reshape(-1, 1).astype(jnp.int32)
            if pad_b:
                lbl = jnp.pad(lbl, ((0, pad_b), (0, 0)), constant_values=-1)
            in_specs += [
                pl.BlockSpec((1, TN), lambda j, i: (0, j)),   # global class ids
                pl.BlockSpec((TM, 1), lambda j, i: (i, 0)),   # labels
            ]
            args += [self._col_ids, lbl]

        kernel = functools.partial(
            _arc_margin_kernel,
            s=self.s, cos_m=self.cos_m, sin_m=self.sin_m, th=self.th, mm=self.mm,
            easy_margin=self.easy_margin, train=train)

        # Explicit scoped-VMEM budget: double-buffered W, x, out tiles (plus the
        # small label/col-id tiles) + slack. Tile selection keeps this well
        # under v7x's 64 MiB physical VMEM; >= 32 MiB is harmless elsewhere.
        out_bytes = jnp.dtype(self.logits_dtype).itemsize
        vmem_est = 2 * (TN * D * 2 + TM * TN * out_bytes + TM * D * 2
                        + TN * 4 + TM * 4) + (2 << 20)
        vmem_limit = int(min(max(vmem_est, 32 << 20), 64 << 20))

        out = pl.pallas_call(
            kernel,
            out_shape=jax.ShapeDtypeStruct((Bp, Cp), self.logits_dtype),
            grid_spec=pltpu.PrefetchScalarGridSpec(
                num_scalar_prefetch=0,
                grid=grid,
                in_specs=in_specs,
                out_specs=pl.BlockSpec((TM, TN), lambda j, i: (i, j))),
            compiler_params=pltpu.CompilerParams(
                dimension_semantics=("parallel", "parallel"),
                vmem_limit_bytes=vmem_limit),
        )(*args)

        # Skip the slice entirely when no padding was added.
        if pad_b or Cp != self.out_features:
            out = out[:B, :self.out_features]
        return out


def _reference(module, x, label=None, train=False, bf16_matmul=True):
    """Pure-JAX reference mirroring the PyTorch forward.

    bf16_matmul=True mirrors the kernel exactly (f32 normalize -> bf16 cast ->
    MXU dot with f32 accumulation); bf16_matmul=False is pure-f32 PyTorch
    semantics.
    """
    x32 = x.astype(jnp.float32)
    w32 = module.weight
    xn = x32 / jnp.maximum(jnp.linalg.norm(x32, axis=-1, keepdims=True), 1e-12)
    wn = w32 / jnp.maximum(jnp.linalg.norm(w32, axis=-1, keepdims=True), 1e-12)
    if bf16_matmul:
        cosine = jnp.dot(xn.astype(jnp.bfloat16), wn.astype(jnp.bfloat16).T,
                         preferred_element_type=jnp.float32)
    else:
        cosine = xn @ wn.T
    sine = jnp.sqrt(jnp.clip(1.0 - cosine ** 2, 0.0, 1.0))
    phi = cosine * module.cos_m - sine * module.sin_m
    if module.easy_margin:
        phi = jnp.where(cosine > 0, phi, cosine)
    else:
        phi = jnp.where(cosine > module.th, phi, cosine - module.mm)
    if train:
        one_hot = jax.nn.one_hot(label, module.out_features, dtype=cosine.dtype)
        out = jnp.where(one_hot == 1, phi, cosine)
    else:
        out = cosine
    return out * module.s


if __name__ == "__main__":
    key = jax.random.PRNGKey(0)
    k_w1, k_w2, k_w3, k_x1, k_x2, k_x3, k_l1, k_l2, k_l3 = jax.random.split(key, 9)

    # Case 1: tiny shapes; out_features < 128 exercises the lane-padding path,
    # B < 16 exercises the row-padding path. Single-tile grid.
    m1 = ArcMarginProductPallas(32, 16, key=k_w1)
    x1 = jax.random.normal(k_x1, (8, 32), dtype=jnp.float32)
    l1 = jax.random.randint(k_l1, (8,), 0, 16, dtype=jnp.int32)

    out1_tr = jax.block_until_ready(m1(x1, l1, train=True))
    out1_ev = jax.block_until_ready(m1(x1, train=False))
    assert out1_tr.shape == (8, 16) and out1_ev.shape == (8, 16)
    assert jnp.allclose(out1_tr, _reference(m1, x1, l1, True), atol=1e-2, rtol=1e-3)
    assert jnp.allclose(out1_ev, _reference(m1, x1, None, False), atol=1e-2, rtol=1e-3)
    # Sanity vs pure-f32 PyTorch semantics (loose tol accounts for bf16 MXU inputs).
    assert jnp.allclose(out1_tr, _reference(m1, x1, l1, True, bf16_matmul=False), atol=0.5)
    assert jnp.allclose(out1_ev, _reference(m1, x1, None, False, bf16_matmul=False), atol=0.5)

    # Case 2: multiple class tiles on the OUTER grid axis (Cp=384, tn=128 -> 3
    # column tiles), ragged batch (B=20 -> padded to 32), easy_margin branch.
    m2 = ArcMarginProductPallas(64, 300, easy_margin=True, key=k_w2, tm=128, tn=128)
    x2 = jax.random.normal(k_x2, (20, 64), dtype=jnp.float32)
    l2 = jax.random.randint(k_l2, (20,), 0, 300, dtype=jnp.int32)

    out2_tr = jax.block_until_ready(m2(x2, l2, train=True))
    out2_ev = jax.block_until_ready(m2(x2, train=False))
    assert out2_tr.shape == (20, 300) and out2_ev.shape == (20, 300)
    assert jnp.allclose(out2_tr, _reference(m2, x2, l2, True), atol=1e-2, rtol=1e-3)
    assert jnp.allclose(out2_ev, _reference(m2, x2, None, False), atol=1e-2, rtol=1e-3)
    # f32-vs-bf16 comparison only on the eval path here: the easy_margin
    # threshold sits at cosine == 0, where a bf16-vs-f32 sign difference can
    # legitimately swap phi/cosine at a label position (expected, not a bug).
    assert jnp.allclose(out2_ev, _reference(m2, x2, None, False, bf16_matmul=False), atol=0.5)

    # Case 3: multiple batch tiles on the INNER grid axis (W block stays
    # resident across them) and multiple class tiles: grid = (2, 3).
    m3 = ArcMarginProductPallas(32, 256, key=k_w3, tm=16, tn=128)
    x3 = jax.random.normal(k_x3, (40, 32), dtype=jnp.float32)
    l3 = jax.random.randint(k_l3, (40,), 0, 256, dtype=jnp.int32)

    out3_tr = jax.block_until_ready(m3(x3, l3, train=True))
    out3_ev = jax.block_until_ready(m3(x3, train=False))
    assert out3_tr.shape == (40, 256) and out3_ev.shape == (40, 256)
    assert jnp.allclose(out3_tr, _reference(m3, x3, l3, True), atol=1e-2, rtol=1e-3)
    assert jnp.allclose(out3_ev, _reference(m3, x3, None, False), atol=1e-2, rtol=1e-3)

    print("KERNEL_OK")
</pallas_src>

<mosaic_0001>
module attributes {stable_mosaic.version = 11 : i64} {
  func.func @_arc_margin_kernel(%arg0: i32, %arg1: i32, %arg2: memref<16x32xbf16, #tpu.memory_space<vmem>>, %arg3: memref<32x128xbf16, #tpu.memory_space<vmem>>, %arg4: memref<1x128xi32, #tpu.memory_space<vmem>>, %arg5: memref<16x1xi32, #tpu.memory_space<vmem>>, %arg6: memref<16x128xf32, #tpu.memory_space<vmem>>) attributes {dimension_semantics = [#tpu.dimension_semantics<parallel>, #tpu.dimension_semantics<parallel>], iteration_bounds = array<i64: 1, 1>, scalar_prefetch = 0 : i64, scratch_operands = 0 : i64, tpu.core_type = #tpu.core_type<tc>, window_params = [{transform_indices = @transform_0, window_bounds = array<i64: 16, 32>}, {transform_indices = @transform_1, window_bounds = array<i64: 32, 128>}, {transform_indices = @transform_2, window_bounds = array<i64: 1, 128>}, {transform_indices = @transform_3, window_bounds = array<i64: 16, 1>}, {transform_indices = @transform_4, window_bounds = array<i64: 16, 128>}]} {
    %c0 = arith.constant 0 : index
    %c0_0 = arith.constant 0 : index
    %0 = vector.load %arg2[%c0, %c0_0] : memref<16x32xbf16, #tpu.memory_space<vmem>>, vector<16x32xbf16>
    %c0_1 = arith.constant 0 : index
    %c0_2 = arith.constant 0 : index
    %1 = vector.load %arg3[%c0_1, %c0_2] : memref<32x128xbf16, #tpu.memory_space<vmem>>, vector<32x128xbf16>
    %cst = arith.constant dense<0.000000e+00> : vector<16x128xf32>
    %2 = tpu.matmul %0, %1, %cst {dimension_numbers = #tpu.dot_dimension_numbers<[1], [0], [0], [1], [0, 0, 1, 1], [], []>} : vector<16x32xbf16>, vector<32x128xbf16>, vector<16x128xf32> -> vector<16x128xf32>
    %3 = arith.mulf %2, %2 : vector<16x128xf32>
    %cst_3 = arith.constant 1.000000e+00 : f32
    %4 = vector.broadcast %cst_3 : f32 to vector<16x128xf32>
    %5 = arith.subf %4, %3 : vector<16x128xf32>
    %cst_4 = arith.constant 0.000000e+00 : f32
    %6 = vector.broadcast %cst_4 : f32 to vector<16x128xf32>
    %7 = arith.maximumf %5, %6 : vector<16x128xf32>
    %8 = math.sqrt %7 : vector<16x128xf32>
    %cst_5 = arith.constant 0.87758255 : f32
    %9 = vector.broadcast %cst_5 : f32 to vector<16x128xf32>
    %10 = arith.mulf %2, %9 : vector<16x128xf32>
    %cst_6 = arith.constant 0.47942555 : f32
    %11 = vector.broadcast %cst_6 : f32 to vector<16x128xf32>
    %12 = arith.mulf %8, %11 : vector<16x128xf32>
    %13 = arith.subf %10, %12 : vector<16x128xf32>
    %cst_7 = arith.constant -0.87758255 : f32
    %14 = vector.broadcast %cst_7 : f32 to vector<16x128xf32>
    %15 = arith.cmpf ogt, %2, %14 : vector<16x128xf32>
    %cst_8 = arith.constant 0.239712775 : f32
    %16 = vector.broadcast %cst_8 : f32 to vector<16x128xf32>
    %17 = arith.subf %2, %16 : vector<16x128xf32>
    %18 = arith.select %15, %13, %17 : vector<16x128xi1>, vector<16x128xf32>
    %c0_9 = arith.constant 0 : index
    %c0_10 = arith.constant 0 : index
    %19 = vector.load %arg4[%c0_9, %c0_10] : memref<1x128xi32, #tpu.memory_space<vmem>>, vector<1x128xi32>
    %c0_11 = arith.constant 0 : index
    %c0_12 = arith.constant 0 : index
    %20 = vector.load %arg5[%c0_11, %c0_12] : memref<16x1xi32, #tpu.memory_space<vmem>>, vector<16x1xi32>
    %21 = vector.broadcast %19 : vector<1x128xi32> to vector<16x128xi32>
    %22 = vector.broadcast %20 : vector<16x1xi32> to vector<16x128xi32>
    %23 = arith.cmpi eq, %21, %22 : vector<16x128xi32>
    %24 = arith.select %23, %18, %2 : vector<16x128xi1>, vector<16x128xf32>
    %cst_13 = arith.constant 3.000000e+01 : f32
    %25 = vector.broadcast %cst_13 : f32 to vector<16x128xf32>
    %26 = arith.mulf %24, %25 : vector<16x128xf32>
    %c0_14 = arith.constant 0 : index
    %c0_15 = arith.constant 0 : index
    %27 = vector.load %arg6[%c0_14, %c0_15] : memref<16x128xf32, #tpu.memory_space<vmem>>, vector<16x128xf32>
    tpu.vector_store %arg6[%c0_14, %c0_15], %26 {strides = array<i32>} : memref<16x128xf32, #tpu.memory_space<vmem>>, vector<16x128xf32>,
    return
  }
  func.func @transform_0(%arg0: i32, %arg1: i32) -> (i32, i32) {
    %c0_i32 = arith.constant 0 : i32
    %c0_i32_0 = arith.constant 0 : i32
    return %arg1, %c0_i32 : i32, i32
  }
  func.func @transform_1(%arg0: i32, %arg1: i32) -> (i32, i32) {
    %c0_i32 = arith.constant 0 : i32
    %c0_i32_0 = arith.constant 0 : i32
    return %c0_i32, %arg0 : i32, i32
  }
  func.func @transform_2(%arg0: i32, %arg1: i32) -> (i32, i32) {
    %c0_i32 = arith.constant 0 : i32
    %c0_i32_0 = arith.constant 0 : i32
    return %c0_i32, %arg0 : i32, i32
  }
  func.func @transform_3(%arg0: i32, %arg1: i32) -> (i32, i32) {
    %c0_i32 = arith.constant 0 : i32
    %c0_i32_0 = arith.constant 0 : i32
    return %arg1, %c0_i32 : i32, i32
  }
  func.func @transform_4(%arg0: i32, %arg1: i32) -> (i32, i32) {
    %c0_i32 = arith.constant 0 : i32
    return %arg1, %arg0 : i32, i32
  }
}

</mosaic_0001>

<llo_original>
// kernel: tpu_custom_call.1
$region0: #{tpu_custom_call.1}
  #allocation0 [shape = 'u32[]', space=smem, size = 0x4, offset = 0x4, fixed_abs, tag = 'smem constant byte address 0x4 - core index']
  #allocation1 [shape = 'u32[144,128]{1,0:T(1,128)}', space=vmem, size = 0x12000, scoped, tag = 'internal scratch']
  %s0 = inlined_call_operand.hbm [shape: bf16[16,32], index: 0, kind: input, shape index: {}]
  %s1 = inlined_call_operand.vmem [shape: bf16[32,128], index: 1, kind: input, shape index: {}]
  %s2 = inlined_call_operand.vmem [shape: s32[1,128], index: 2, kind: input, shape index: {}]
  %s3 = inlined_call_operand.vmem [shape: s32[16,1], index: 3, kind: input, shape index: {}]
  %s4 = inlined_call_operand.hbm [shape: f32[16,128], index: 4, kind: output, shape index: {}]
  %s5 = sld [smem:[#allocation0]]
  $region30: #{tpu_custom_call.1} parent=0
    _
  %s7 = ssub.s32 1, %s5
  %s8 = scalar_select 0, %s7, %s5
  $region1: #{tpu_custom_call.1} parent=0
    #allocation2 [shape = 'u8[4096]{0}', space=vmem, size = 0x1000, scoped, tag = 'input window, operand 0, single buffered']
    #allocation3 [shape = 's32[1]{0}', space=sflag, size = 0x4, scoped, tag = 'scoped memory for tpu_custom_call.1']
    #allocation4 [shape = 's32[1]{0}', space=sflag, size = 0x4, scoped, tag = 'scoped memory for tpu_custom_call.1']
    #allocation5 [shape = 'u8[8192]{0}', space=vmem, size = 0x2000, scoped, tag = 'output window, operand 0, single buffered']
    %9 = vsyncpa [#allocation3], 0
    %10 = vsyncpa [#allocation4], 0
    // Predicated region
    $region2: #{tpu_custom_call.1} parent=1 // pred_check
      _
    $region3: #{tpu_custom_call.1} parent=1 // pred_check_branch
      %12 = sbr.rel (0) target = $region5
    $region4: #{tpu_custom_call.1} parent=1 // pred_region
      %s14 = ssub.s32 128, 128
      %15 = vsyncadd [#allocation3], %s14
      %s16 = sshll.u32 [#allocation2], 4
      %s17 = int_to_ptr.vmem [resolvable:$true] %s16
      %22 = dma.hbm_to_vmem [thread:$0]  %s0, 128, %s17, [#allocation3], 64, 64, 4
    $region5: #{tpu_custom_call.1} parent=1 // pred_fallthru
      _
    // Predicated region
    $region6: #{tpu_custom_call.1} parent=1 // pred_check
      _
    $region7: #{tpu_custom_call.1} parent=1 // pred_check_branch
      %24 = sbr.rel (0) target = $region9
    $region8: #{tpu_custom_call.1} parent=1 // pred_region
      _
    $region9: #{tpu_custom_call.1} parent=1 // pred_fallthru
      _
    // Predicated region
    $region10: #{tpu_custom_call.1} parent=1 // pred_check
      _
    $region11: #{tpu_custom_call.1} parent=1 // pred_check_branch
      %26 = sbr.rel (0) target = $region13
    $region12: #{tpu_custom_call.1} parent=1 // pred_region
      _
    $region13: #{tpu_custom_call.1} parent=1 // pred_fallthru
      _
    // Predicated region
    $region14: #{tpu_custom_call.1} parent=1 // pred_check
      _
    $region15: #{tpu_custom_call.1} parent=1 // pred_check_branch
      %28 = sbr.rel (0) target = $region17
    $region16: #{tpu_custom_call.1} parent=1 // pred_region
      _
    $region17: #{tpu_custom_call.1} parent=1 // pred_fallthru
      _
    // Predicated region
    $region18: #{tpu_custom_call.1} parent=1 // pred_check
      _
    $region19: #{tpu_custom_call.1} parent=1 // pred_check_branch
      %30 = sbr.rel (0) target = $region21
    $region20: #{tpu_custom_call.1} parent=1 // pred_region
      %31 = dma.done [#allocation3], 128
    $region21: #{tpu_custom_call.1} parent=1 // pred_fallthru
      _
    %v33 = vld [vmem:[#allocation2] sm:$0xf]
    %v34 = vld [vmem:[#allocation2 + $0x4] sm:$0xf]
    %v35 = vld [vmem:[%s1] sm:$0xf]
    %v36 = vld [vmem:[%s1 + $0x4] sm:$0xf]
    %v37 = vld [vmem:[%s1 + $0x8] sm:$0xf]
    %v38 = vld [vmem:[%s1 + $0xc] sm:$0xf]
    %v41 = vunpack.c.l.b16 %v33
    %v42 = vunpack.c.l.b16 %v34
    %v43 = vpack.c.b16 %v42, %v41
    %v48 = vunpack.c.l.b16 %v35
    %v49 = vunpack.c.l.b16 %v36
    %v50 = vunpack.c.l.b16 %v37
    %v51 = vunpack.c.l.b16 %v38
    %v52 = vpack.c.b16 %v49, %v48
    %v53 = vpack.c.b16 %v51, %v50
    %vm56 = vcmask 261120
    %v58 = vsel %vm56, %v43, 0
    %60 = vmatprep.subr.bf16.mxu0 0
    %61 = vmatpush1.bf16.msra.mxu0 0
    %62 = vmatprep.subr.bf16.mxu0 0
    %63 = vmatpush1.bf16.msra.mxu0 0
    %64 = vmatprep.subr.bf16.mxu0 0
    %65 = vmatpush1.bf16.msra.mxu0 0
    %66 = vmatprep.subr.bf16.mxu0 0
    %67 = vmatpush1.bf16.msra.mxu0 0
    %68 = vmatprep.subr.bf16.mxu0 0
    %69 = vmatpush1.bf16.msra.mxu0 0
    %70 = vmatprep.subr.bf16.mxu0 0
    %71 = vmatpush1.bf16.msra.mxu0 0
    %72 = vmatprep.subr.bf16.mxu0 0
    %73 = vmatpush1.bf16.msra.mxu0 %v53
    %74 = vmatprep.subr.bf16.mxu0 0
    %75 = vmatpush1.bf16.msra.mxu0 %v52
    %76 = vmatprep.subr.bf16.mxu0 0
    %77 = vmatpush2.bf16.msra.mxu0 0
    %78 = vmatprep.subr.bf16.mxu0 0
    %79 = vmatpush2.bf16.msra.mxu0 0
    %80 = vmatprep.subr.bf16.mxu0 0
    %81 = vmatpush2.bf16.msra.mxu0 0
    %82 = vmatprep.subr.bf16.mxu0 0
    %83 = vmatpush2.bf16.msra.mxu0 0
    %84 = vmatprep.subr.bf16.mxu0 0
    %85 = vmatpush2.bf16.msra.mxu0 0
    %86 = vmatprep.subr.bf16.mxu0 0
    %87 = vmatpush2.bf16.msra.mxu0 0
    %88 = vmatprep.subr.bf16.mxu0 0
    %89 = vmatpush2.bf16.msra.mxu0 0
    %90 = vmatprep.subr.bf16.mxu0 0
    %91 = vmatpush2.bf16.msra.mxu0 0
    %92 = vmatprep.mubr.bf16.mxu0 0
    %93 = vmatmul.mubr.bf16.gmra.mxu0 %v58
    %v94 = vpop.f32.mrf.mxu0
    %v95 = vadd.f32 0.0, %v94
    %v96 = vpop.f32.mrf.mxu0
    %v97 = vpop.f32.mrf.mxu0
    %v98 = vadd.f32 0.0, %v97
    %v99 = vpop.f32.mrf.mxu0
    %100 = vdwg.mxu0
    %v101 = vmul.f32 %v95, %v95
    %v102 = vmul.f32 %v98, %v98
    %v103 = vsub.f32 1.0, %v101
    %v104 = vsub.f32 1.0, %v102
    %v105 = vmax.f32 %v103, 0.0
    %v106 = vmax.f32 %v104, 0.0
    %v107 = vrsqrt.pop %v105
    %v108 = vmul.f32 %v105, %v107
    %vm109 = vcmp.eq.f32.partialorder %v105, inf
    %v110 = vsel %vm109, %v105, %v108
    %vm111 = vcmp.eq.f32.partialorder %v105, 0.0
    %v112 = vand.u32 %v105, 2147483648
    %v113 = vsel %vm111, %v112, %v110
    %v114 = vrsqrt.pop %v106
    %v115 = vmul.f32 %v106, %v114
    %vm116 = vcmp.eq.f32.partialorder %v106, inf
    %v117 = vsel %vm116, %v106, %v115
    %vm118 = vcmp.eq.f32.partialorder %v106, 0.0
    %v119 = vand.u32 %v106, 2147483648
    %v120 = vsel %vm118, %v119, %v117
    %v121 = vmul.f32 %v95, 0.87758255
    %v122 = vmul.f32 %v98, 0.87758255
    %v123 = vmul.f32 %v113, 0.47942555
    %v124 = vmul.f32 %v120, 0.47942555
    %v125 = vsub.f32 %v121, %v123
    %v126 = vsub.f32 %v122, %v124
    %vm127 = vcmp.gt.f32.partialorder %v95, -0.87758255
    %vm128 = vcmp.gt.f32.partialorder %v98, -0.87758255
    %v129 = vsub.f32 %v95, 0.23971277
    %v130 = vsub.f32 %v98, 0.23971277
    %v131 = vsel %vm127, %v125, %v129
    %v132 = vsel %vm128, %v126, %v130
    %v133 = vld [vmem:[%s2] sm:$0x1]
    %v134 = vld [vmem:[%s3] sm:$0xff]
    %v135 = vld [vmem:[%s3 + $0x8] sm:$0xff]
    %v136 = vlaneseq
    %v137 = vshrl.u32 %v136, 7
    %v138 = vsub.s32 0, %v137
    %v139 = vrot.slane %v133, %v138
    %140 = vset.pattern.permute.xlu0 0
    %141 = vperm.xlu0 %140, %v134
    %v142 = vpop.permute.xlu0 %141
    %143 = vset.pattern.permute.xlu0 0
    %144 = vperm.xlu0 %143, %v135
    %v145 = vpop.permute.xlu0 %144
    %vm146 = vcmp.eq.s32.totalorder %v139, %v142
    %vm147 = vcmp.eq.s32.totalorder %v139, %v145
    %v148 = vsel %vm146, %v131, %v95
    %v149 = vsel %vm147, %v132, %v98
    %v150 = vmul.f32 %v148, 30.0
    %v151 = vmul.f32 %v149, 30.0
    %152 = vst [vmem:[#allocation5] sm:$0xff] %v150
    %153 = vst [vmem:[#allocation5 + $0x8] sm:$0xff] %v151
    // Predicated region
    $region22: #{tpu_custom_call.1} parent=1 // pred_check
      _
    $region23: #{tpu_custom_call.1} parent=1 // pred_check_branch
      %155 = sbr.rel (0) target = $region25
    $region24: #{tpu_custom_call.1} parent=1 // pred_region
      %s157 = ssub.s32 256, 256
      %158 = vsyncadd [#allocation4], %s157
      %s159 = sshll.u32 [#allocation5], 4
      %s160 = int_to_ptr.vmem [resolvable:$true] %s159
      %165 = dma.vmem_to_hbm [thread:$0]  %s160, 256, %s4, [#allocation4], 128, 128, 8
    $region25: #{tpu_custom_call.1} parent=1 // pred_fallthru
      _
    // Predicated region
    $region26: #{tpu_custom_call.1} parent=1 // pred_check
      _
    $region27: #{tpu_custom_call.1} parent=1 // pred_check_branch
      %167 = sbr.rel (0) target = $region29
    $region28: #{tpu_custom_call.1} parent=1 // pred_region
      %168 = dma.done [#allocation4], 256
    $region29: #{tpu_custom_call.1} parent=1 // pred_fallthru
      _
    %169 = vsyncpa [#allocation3], 1
    %170 = vsyncpa [#allocation4], 1

</llo_original>
